<compile_context>
chip_gen: v7x
topology: tpu7x:2x2x1
jax: 0.10.0
libtpu: 0.0.40
codegen_flags: <defaults>
</compile_context>

<pallas_src>
import functools
import math
import re

import jax
import jax.numpy as jnp
import numpy as np
from jax import lax
from jax.experimental import pallas as pl
from jax.experimental.pallas import tpu as pltpu


# --------------------------------------------------------------------------
# Hardware-aware defaults
# --------------------------------------------------------------------------
def _tpu_generation():
    try:
        kind = jax.devices()[0].device_kind.lower()
    except Exception:
        return 0
    m = re.search(r"(\d+)", kind)
    return int(m.group(1)) if m else 0


def _vmem_capacity_bytes():
    try:
        info = pltpu.get_tpu_info()
        cap = getattr(info, "vmem_capacity_bytes", None)
        if cap:
            return int(cap)
    except Exception:
        pass
    # Conservative fallback: v7x has the smallest per-core VMEM (64 MiB).
    return 64 * 1024 * 1024


def _vmem_limit_bytes(need):
    cap = _vmem_capacity_bytes()
    hi = int(0.85 * cap)
    want = max(32 * 1024 * 1024, 2 * int(need))
    return int(max(int(need) + (4 << 20), min(want, hi)))


# --------------------------------------------------------------------------
# Kernel 1: fused linear projection  y = (x @ W^T + b) * scale
# --------------------------------------------------------------------------
def _linear_kernel(x_ref, w_ref, b_ref, o_ref, *, scale):
    # x_ref: (1, TN, Din), w_ref: (Din, Dout) pre-transposed, b_ref: (1, Dout)
    y = jnp.dot(x_ref[0], w_ref[...],
                preferred_element_type=jnp.float32) + b_ref[...]
    if scale != 1.0:
        y = y * scale
    o_ref[0] = y.astype(o_ref.dtype)


def _linear(x, w_t, b2, *, scale, out_dtype, row_block=None):
    """y[b, n, :] = (x[b, n, :] @ w_t + b2) * scale, tiled over (batch, rows)."""
    B, N, Din = x.shape
    Din_w, Dout = w_t.shape
    assert Din_w == Din
    TN = row_block if row_block is not None else min(N, 256)
    assert N % TN == 0 and (TN % 8 == 0 or TN == N)

    csz = jnp.dtype(x.dtype).itemsize
    osz = jnp.dtype(out_dtype).itemsize
    need = (2 * TN * Din * csz          # x tile (double buffered)
            + 2 * Din * Dout * csz      # weight (constant index, resident)
            + 2 * Dout * 4              # bias
            + 2 * TN * Dout * osz       # output tile
            + 2 * TN * Dout * 4)        # f32 intermediate allowance

    return pl.pallas_call(
        functools.partial(_linear_kernel, scale=scale),
        out_shape=jax.ShapeDtypeStruct((B, N, Dout), out_dtype),
        grid_spec=pltpu.PrefetchScalarGridSpec(
            num_scalar_prefetch=0,
            grid=(B, N // TN),
            in_specs=[
                pl.BlockSpec((1, TN, Din), lambda b, i: (b, i, 0)),
                pl.BlockSpec((Din, Dout), lambda b, i: (0, 0)),
                pl.BlockSpec((1, Dout), lambda b, i: (0, 0)),
            ],
            out_specs=pl.BlockSpec((1, TN, Dout), lambda b, i: (b, i, 0)),
        ),
        compiler_params=pltpu.CompilerParams(
            dimension_semantics=("parallel", "parallel"),
            vmem_limit_bytes=_vmem_limit_bytes(need),
        ),
    )(x, w_t, b2)


# --------------------------------------------------------------------------
# Kernel 2: per-head flash attention + fused (per-head accumulated) output proj
# --------------------------------------------------------------------------
def _flash_kernel(q_ref, k_ref, v_ref, wo_ref, bo_ref, out_ref,
                  m_scr, l_scr, acc_scr, oacc_scr, *, approx_recip):
    """Grid = (batch b, q-tile qi, head h, kv-tile ki).

    q_ref  : (1, 1, TQ, d)   queries for (b, h, qi), pre-scaled by 1/sqrt(d)
    k_ref  : (1, 1, TK, d)   keys   for (b, h, ki)
    v_ref  : (1, 1, TK, d)   values for (b, h, ki)
    wo_ref : (d, Dm)         rows h*d:(h+1)*d of Wo^T
    bo_ref : (1, Dm)         output-projection bias (f32)
    out_ref: (1, TQ, Dm)     final output tile (lane-dense), written once
    m/l    : (TQ, 1)   f32   online-softmax running max / denom (per head)
    acc    : (TQ, d)   f32   online-softmax numerator (per head)
    oacc   : (TQ, Dm)  f32   output-projection accumulator (across heads)
    """
    h = pl.program_id(2)
    ki = pl.program_id(3)
    cdt = q_ref.dtype  # MXU compute dtype (f32 or bf16); accumulation is f32.

    @pl.when(ki == 0)
    def _init_head():
        m_scr[...] = jnp.full_like(m_scr, -jnp.inf)
        l_scr[...] = jnp.zeros_like(l_scr)
        acc_scr[...] = jnp.zeros_like(acc_scr)

    @pl.when((ki == 0) & (h == 0))
    def _init_out():
        oacc_scr[...] = jnp.zeros_like(oacc_scr)

    q = q_ref[0, 0]          # (TQ, d)
    k = k_ref[0, 0]          # (TK, d)
    v = v_ref[0, 0]          # (TK, d)

    # Scores: contract trailing d of both operands (no transpose op emitted).
    s = lax.dot_general(q, k, (((1,), (1,)), ((), ())),
                        preferred_element_type=jnp.float32)       # (TQ, TK)

    m_prev = m_scr[...]
    m_new = jnp.maximum(m_prev, jnp.max(s, axis=-1, keepdims=True))
    alpha = jnp.exp(m_prev - m_new)
    p = jnp.exp(s - m_new)
    l_scr[...] = alpha * l_scr[...] + jnp.sum(p, axis=-1, keepdims=True)
    acc_scr[...] = alpha * acc_scr[...] + jnp.dot(
        p.astype(cdt), v, preferred_element_type=jnp.float32)
    m_scr[...] = m_new

    @pl.when(ki == pl.num_programs(3) - 1)
    def _finish_head():
        o = acc_scr[...] * pl.reciprocal(l_scr[...], approx=approx_recip)
        # Linear output projection split over heads: out += o_h @ Wo^T[h*d:(h+1)*d]
        oacc_scr[...] += jnp.dot(o.astype(cdt), wo_ref[...],
                                 preferred_element_type=jnp.float32)

        @pl.when(h == pl.num_programs(2) - 1)
        def _store():
            out_ref[0] = (oacc_scr[...] + bo_ref[...]).astype(out_ref.dtype)


# --------------------------------------------------------------------------
# Public wrapper
# --------------------------------------------------------------------------
def multi_head_attention_spatial(q_in, k_in, v_in,
                                 wq, bq, wk, bk, wv, bv, wo, bo, *,
                                 n_head, d_head,
                                 q_block=None, kv_block=None, proj_block=None,
                                 compute_dtype=None, approx_reciprocal=True):
    """Pallas forward for MultiHeadAttentionSpatial (mask=None, eval dropout).

    Weights follow the nn.Linear convention (w is (out, in)); the wrapper
    pre-transposes them once so the kernels never transpose.
    """
    B, L, Dm = q_in.shape
    Bk, T, Dmk = k_in.shape
    assert (B, Dm) == (Bk, Dmk) and v_in.shape == k_in.shape
    Di = n_head * d_head
    assert wq.shape == (Di, Dm) and wk.shape == (Di, Dm) and wv.shape == (Di, Dm)
    assert wo.shape == (Dm, Di)
    assert bq.shape == (Di,) and bk.shape == (Di,) and bv.shape == (Di,)
    assert bo.shape == (Dm,)
    assert d_head % 8 == 0 or n_head == 1, "d_head must be a multiple of 8"

    out_dtype = q_in.dtype
    if compute_dtype is not None:
        cdt = compute_dtype
    else:
        # bf16 MXU inputs (f32 accumulation) by default on bf16-native gens.
        cdt = jnp.bfloat16 if _tpu_generation() >= 6 else q_in.dtype

    scale = 1.0 / math.sqrt(d_head)

    # One-time wrapper glue: cast MXU operands, pre-transpose weights, 2-D f32 biases.
    xq = q_in.astype(cdt)
    xk = k_in.astype(cdt)
    xv = v_in.astype(cdt)
    wq_t = wq.T.astype(cdt)   # (Dm, Di)
    wk_t = wk.T.astype(cdt)
    wv_t = wv.T.astype(cdt)
    wo_t = wo.T.astype(cdt)   # (Di, Dm)
    bq2 = bq.reshape(1, Di).astype(jnp.float32)
    bk2 = bk.reshape(1, Di).astype(jnp.float32)
    bv2 = bv.reshape(1, Di).astype(jnp.float32)
    bo2 = bo.reshape(1, Dm).astype(jnp.float32)

    # --- Phase 1: fused input projections (each token projected exactly once).
    # The softmax scale is folded into Q here, so the kv loop has no scale mul.
    qp = _linear(xq, wq_t, bq2, scale=scale, out_dtype=cdt, row_block=proj_block)
    kp = _linear(xk, wk_t, bk2, scale=1.0, out_dtype=cdt, row_block=proj_block)
    vp = _linear(xv, wv_t, bv2, scale=1.0, out_dtype=cdt, row_block=proj_block)

    # Wrapper-side layout plumbing (keeps kernels transpose-free):
    # (B, N, H*d) -> (B, H, N, d)
    qh = qp.reshape(B, L, n_head, d_head).transpose(0, 2, 1, 3)
    kh = kp.reshape(B, T, n_head, d_head).transpose(0, 2, 1, 3)
    vh = vp.reshape(B, T, n_head, d_head).transpose(0, 2, 1, 3)

    # --- Phase 2: flash attention (online softmax) + fused output projection.
    TQ = q_block if q_block is not None else min(L, 256)
    TK = kv_block if kv_block is not None else min(T, 512)
    assert L % TQ == 0 and T % TK == 0, "seq lengths must divide block sizes"
    assert (TQ % 8 == 0 or TQ == L) and (TK % 8 == 0 or TK == T)

    csz = jnp.dtype(cdt).itemsize
    osz = jnp.dtype(out_dtype).itemsize
    need = (2 * TQ * d_head * csz                 # q tile (double buffered)
            + 2 * 2 * TK * d_head * csz           # k, v tiles
            + 2 * d_head * Dm * csz               # per-head Wo^T slice
            + 2 * Dm * 4                          # bo
            + 2 * TQ * Dm * osz                   # output tile
            + TQ * (2 + d_head + Dm) * 4          # m/l/acc/out accumulators
            + 4 * TQ * TK * 4)                    # live s/p intermediates

    kernel = functools.partial(_flash_kernel, approx_recip=approx_reciprocal)
    grid = (B, L // TQ, n_head, T // TK)

    return pl.pallas_call(
        kernel,
        out_shape=jax.ShapeDtypeStruct((B, L, Dm), out_dtype),
        grid_spec=pltpu.PrefetchScalarGridSpec(
            num_scalar_prefetch=0,
            grid=grid,
            in_specs=[
                pl.BlockSpec((1, 1, TQ, d_head),
                             lambda b, qi, h, ki: (b, h, qi, 0)),   # Q
                pl.BlockSpec((1, 1, TK, d_head),
                             lambda b, qi, h, ki: (b, h, ki, 0)),   # K
                pl.BlockSpec((1, 1, TK, d_head),
                             lambda b, qi, h, ki: (b, h, ki, 0)),   # V
                pl.BlockSpec((d_head, Dm),
                             lambda b, qi, h, ki: (h, 0)),          # Wo^T[h]
                pl.BlockSpec((1, Dm),
                             lambda b, qi, h, ki: (0, 0)),          # bo
            ],
            out_specs=pl.BlockSpec((1, TQ, Dm),
                                   lambda b, qi, h, ki: (b, qi, 0)),
            scratch_shapes=[
                pltpu.VMEM((TQ, 1), jnp.float32),        # running max
                pltpu.VMEM((TQ, 1), jnp.float32),        # running denom
                pltpu.VMEM((TQ, d_head), jnp.float32),   # PV accumulator
                pltpu.VMEM((TQ, Dm), jnp.float32),       # output-proj accumulator
            ],
        ),
        compiler_params=pltpu.CompilerParams(
            # Output block and oacc scratch carry across (h, ki) -> arbitrary;
            # b and qi have no cross-iteration state -> megacore parallel.
            dimension_semantics=("parallel", "parallel", "arbitrary", "arbitrary"),
            vmem_limit_bytes=_vmem_limit_bytes(need),
        ),
    )(qh, kh, vh, wo_t, bo2)


# --------------------------------------------------------------------------
# Pure-JAX reference (mirrors the PyTorch forward, mask=None path)
# --------------------------------------------------------------------------
def multi_head_attention_spatial_ref(q, k, v, wq, bq, wk, bk, wv, bv, wo, bo,
                                     *, n_head, d_head):
    B, L, _ = q.shape
    qp = q @ wq.T + bq
    kp = k @ wk.T + bk
    vp = v @ wv.T + bv

    def split(t):
        Bn, Nn, _ = t.shape
        return t.reshape(Bn, Nn, n_head, d_head).transpose(2, 0, 1, 3)  # (H,B,N,d)

    qh, kh, vh = split(qp), split(kp), split(vp)
    attn = jnp.einsum('hblk,hbtk->hblt', qh, kh) / np.sqrt(d_head)
    attn = jax.nn.softmax(attn, axis=-1)
    out = jnp.einsum('hblt,hbtv->hblv', attn, vh)                 # (H,B,L,d)
    out = out.transpose(1, 2, 0, 3).reshape(B, L, n_head * d_head)
    return out @ wo.T + bo                                        # eval dropout = id


if __name__ == "__main__":
    # Small shapes; blocks chosen so the grid exercises batch, q-tile, head
    # and kv-tile (online softmax / per-head output accumulation) axes.
    B, L, T = 2, 16, 16
    d_model = 32
    n_head, d_head = 2, 16
    d_inner = n_head * d_head

    key = jax.random.PRNGKey(0)
    ks = jax.random.split(key, 11)
    q_in = jax.random.normal(ks[0], (B, L, d_model), dtype=jnp.float32)
    k_in = jax.random.normal(ks[1], (B, T, d_model), dtype=jnp.float32)
    v_in = jax.random.normal(ks[2], (B, T, d_model), dtype=jnp.float32)

    # nn.Linear-shaped parameters: weight (out, in), bias (out,).
    wq = jax.random.normal(ks[3], (d_inner, d_model), jnp.float32) * 0.05
    bq = jax.random.normal(ks[4], (d_inner,), jnp.float32) * 0.05
    wk = jax.random.normal(ks[5], (d_inner, d_model), jnp.float32) * 0.05
    bk = jax.random.normal(ks[6], (d_inner,), jnp.float32) * 0.05
    wv = jax.random.normal(ks[7], (d_inner, d_model), jnp.float32) * 0.05
    bv = jax.random.normal(ks[8], (d_inner,), jnp.float32) * 0.05
    wo = jax.random.normal(ks[9], (d_model, d_inner), jnp.float32) * 0.05
    bo = jax.random.normal(ks[10], (d_model,), jnp.float32) * 0.05

    ref = multi_head_attention_spatial_ref(
        q_in, k_in, v_in, wq, bq, wk, bk, wv, bv, wo, bo,
        n_head=n_head, d_head=d_head)

    # Explicit f32 compute path (tolerance covers the approx EUP reciprocal).
    out_f32 = multi_head_attention_spatial(
        q_in, k_in, v_in, wq, bq, wk, bk, wv, bv, wo, bo,
        n_head=n_head, d_head=d_head, q_block=8, kv_block=8, proj_block=8,
        compute_dtype=jnp.float32)
    out_f32 = jax.block_until_ready(out_f32)
    np.testing.assert_allclose(np.asarray(out_f32), np.asarray(ref),
                               rtol=5e-3, atol=5e-3)

    # bf16 MXU-input path with f32 accumulation.
    out_bf16 = multi_head_attention_spatial(
        q_in, k_in, v_in, wq, bq, wk, bk, wv, bv, wo, bo,
        n_head=n_head, d_head=d_head, q_block=8, kv_block=8, proj_block=8,
        compute_dtype=jnp.bfloat16)
    out_bf16 = jax.block_until_ready(out_bf16)
    np.testing.assert_allclose(np.asarray(out_bf16), np.asarray(ref),
                               rtol=5e-2, atol=5e-2)

    # Generation-aware default path (bf16 on v6e/v7x, input dtype otherwise).
    out_def = multi_head_attention_spatial(
        q_in, k_in, v_in, wq, bq, wk, bk, wv, bv, wo, bo,
        n_head=n_head, d_head=d_head)
    out_def = jax.block_until_ready(out_def)
    np.testing.assert_allclose(np.asarray(out_def), np.asarray(ref),
                               rtol=6e-2, atol=6e-2)

    print("KERNEL_OK")
</pallas_src>

<mosaic_0001>
module attributes {stable_mosaic.version = 11 : i64} {
  func.func @_linear_kernel(%arg0: i32, %arg1: i32, %arg2: memref<1x8x32xf32, #tpu.memory_space<vmem>>, %arg3: memref<32x32xf32, #tpu.memory_space<vmem>>, %arg4: memref<1x32xf32, #tpu.memory_space<vmem>>, %arg5: memref<1x8x32xf32, #tpu.memory_space<vmem>>) attributes {dimension_semantics = [#tpu.dimension_semantics<parallel>, #tpu.dimension_semantics<parallel>], iteration_bounds = array<i64: 2, 2>, scalar_prefetch = 0 : i64, scratch_operands = 0 : i64, tpu.core_type = #tpu.core_type<tc>, window_params = [{transform_indices = @transform_0, window_bounds = array<i64: 1, 8, 32>}, {pipeline_mode = #tpu.pipeline_mode<synchronous>, transform_indices = @transform_1, window_bounds = array<i64: 32, 32>}, {pipeline_mode = #tpu.pipeline_mode<synchronous>, transform_indices = @transform_2, window_bounds = array<i64: 1, 32>}, {transform_indices = @transform_3, window_bounds = array<i64: 1, 8, 32>}]} {
    %c0 = arith.constant 0 : index
    %c0_0 = arith.constant 0 : index
    %c0_1 = arith.constant 0 : index
    %0 = vector.load %arg2[%c0, %c0_0, %c0_1] : memref<1x8x32xf32, #tpu.memory_space<vmem>>, vector<1x8x32xf32>
    %1 = vector.shape_cast %0 : vector<1x8x32xf32> to vector<8x32xf32>
    %c0_2 = arith.constant 0 : index
    %c0_3 = arith.constant 0 : index
    %2 = vector.load %arg3[%c0_2, %c0_3] : memref<32x32xf32, #tpu.memory_space<vmem>>, vector<32x32xf32>
    %cst = arith.constant dense<0.000000e+00> : vector<8x32xf32>
    %3 = tpu.matmul %1, %2, %cst {dimension_numbers = #tpu.dot_dimension_numbers<[1], [0], [0], [1], [0, 0, 1, 1], [], []>} : vector<8x32xf32>, vector<32x32xf32>, vector<8x32xf32> -> vector<8x32xf32>
    %c0_4 = arith.constant 0 : index
    %c0_5 = arith.constant 0 : index
    %4 = vector.load %arg4[%c0_4, %c0_5] : memref<1x32xf32, #tpu.memory_space<vmem>>, vector<1x32xf32>
    %5 = vector.broadcast %4 : vector<1x32xf32> to vector<8x32xf32>
    %6 = arith.addf %3, %5 : vector<8x32xf32>
    %cst_6 = arith.constant 2.500000e-01 : f32
    %7 = vector.broadcast %cst_6 : f32 to vector<8x32xf32>
    %8 = arith.mulf %6, %7 : vector<8x32xf32>
    %c0_7 = arith.constant 0 : index
    %c0_8 = arith.constant 0 : index
    %c0_9 = arith.constant 0 : index
    %9 = vector.load %arg5[%c0_7, %c0_8, %c0_9] : memref<1x8x32xf32, #tpu.memory_space<vmem>>, vector<1x8x32xf32>
    %10 = vector.shape_cast %9 : vector<1x8x32xf32> to vector<8x32xf32>
    %11 = vector.shape_cast %8 : vector<8x32xf32> to vector<1x8x32xf32>
    tpu.vector_store %arg5[%c0_7, %c0_8, %c0_9], %11 {strides = array<i32>} : memref<1x8x32xf32, #tpu.memory_space<vmem>>, vector<1x8x32xf32>,
    return
  }
  func.func @transform_0(%arg0: i32, %arg1: i32) -> (i32, i32, i32) {
    %c0_i32 = arith.constant 0 : i32
    %c0_i32_0 = arith.constant 0 : i32
    return %arg0, %arg1, %c0_i32 : i32, i32, i32
  }
  func.func @transform_1(%arg0: i32, %arg1: i32) -> (i32, i32) {
    %c0_i32 = arith.constant 0 : i32
    %c0_i32_0 = arith.constant 0 : i32
    %c0_i32_1 = arith.constant 0 : i32
    return %c0_i32, %c0_i32_0 : i32, i32
  }
  func.func @transform_2(%arg0: i32, %arg1: i32) -> (i32, i32) {
    %c0_i32 = arith.constant 0 : i32
    %c0_i32_0 = arith.constant 0 : i32
    %c0_i32_1 = arith.constant 0 : i32
    return %c0_i32, %c0_i32_0 : i32, i32
  }
  func.func @transform_3(%arg0: i32, %arg1: i32) -> (i32, i32, i32) {
    %c0_i32 = arith.constant 0 : i32
    %c0_i32_0 = arith.constant 0 : i32
    return %arg0, %arg1, %c0_i32 : i32, i32, i32
  }
}

</mosaic_0001>

<llo_original>
// kernel: tpu_custom_call.1
$region0: #{tpu_custom_call.1}
  #allocation0 [shape = 'u32[]', space=smem, size = 0x4, offset = 0x4, fixed_abs, tag = 'smem constant byte address 0x4 - core index']
  #allocation1 [shape = 'u32[144,128]{1,0:T(1,128)}', space=vmem, size = 0x12000, scoped, tag = 'internal scratch']
  %s0 = inlined_call_operand.hbm [shape: f32[2,16,32], index: 0, kind: input, shape index: {}]
  %s1 = inlined_call_operand.hbm [shape: f32[32,32], index: 1, kind: input, shape index: {}]
  %s2 = inlined_call_operand.vmem [shape: f32[1,32], index: 2, kind: input, shape index: {}]
  %s3 = inlined_call_operand.hbm [shape: f32[2,16,32], index: 3, kind: output, shape index: {}]
  %s4 = sld [smem:[#allocation0]]
  $region53: #{tpu_custom_call.1} parent=0
    _
  %s6 = ssub.s32 1, %s4
  %s7 = scalar_select 0, %s6, %s4
  $region1: #{tpu_custom_call.1} parent=0
    #allocation2 [shape = 'u8[8192]{0}', space=vmem, size = 0x2000, scoped, tag = 'input window, operand 0']
    #allocation3 [shape = 's32[2]{0}', space=sflag, size = 0x8, scoped, tag = 'scoped memory for tpu_custom_call.1']
    #allocation4 [shape = 's32[2]{0}', space=sflag, size = 0x8, scoped, tag = 'scoped memory for tpu_custom_call.1']
    #allocation5 [shape = 'u8[16384]{0}', space=vmem, size = 0x4000, scoped, tag = 'input window, operand 1, single buffered']
    #allocation6 [shape = 's32[1]{0}', space=sflag, size = 0x4, scoped, tag = 'scoped memory for tpu_custom_call.1']
    #allocation7 [shape = 'u8[8192]{0}', space=vmem, size = 0x2000, scoped, tag = 'output window, operand 0']
    %8 = vsyncpa [#allocation3], 0
    %s9 = scalar_lea.sflag [#allocation3], 1
    %10 = vsyncpa %s9, 0
    %11 = vsyncpa [#allocation6], 0
    %12 = vsyncpa [#allocation4], 0
    %s13 = scalar_lea.sflag [#allocation4], 1
    %14 = vsyncpa %s13, 0
    loop: start=0, step=1, limit=6
    $region2: #{tpu_custom_call.1} parent=1 // loop_pre_header
      _
    $region3: #{tpu_custom_call.1} parent=1 // loop_header
      %s16 = sphi 0, %s20
      %p17 = scmp.ge.s32.totalorder %s16, 6
      %s23 = sphi 0, %s35
      %s24 = sphi 0, %s31
      %s25 = sphi 0, %s23
      %s26 = sphi 0, %s24
      %s27 = sphi 0, %s25
      %s28 = sphi 0, %s26
      %s40 = sphi 0, %s42
      %s43 = sphi 0, %s40
      %s44 = sphi 0, %s43
      %s60 = sphi 0, %s44
      %s64 = sphi 0, %s64
      %s66 = sphi 0, %s64
      %s67 = sphi 0, %s66
      %s81 = sphi 0, %s67
      %s85 = sphi 0, %s85
      %s87 = sphi 0, %s85
      %s88 = sphi 0, %s87
      %s102 = sphi 0, %s88
      %s110 = sphi 0, %s112
      %s113 = sphi 0, %s110
      %s114 = sphi 0, %s113
      %s130 = sphi 0, %s114
    $region4: #{tpu_custom_call.1} parent=1 // loop_header_branch
      %19 = sbr.rel (%p17) target = $region8
    $region5: #{tpu_custom_call.1} parent=1 // loop_body
      %s21 = ssub.s32 %s16, 1
      %s22 = ssub.s32 %s16, 2
      %s29 = sadd.s32 1, %s24
      %p30 = scmp.ge.s32.totalorder %s29, 2
      %s31 = scalar_select %p30, 0, %s29
      %s32 = sadd.s32 1, %s23
      %s33 = scalar_select %p30, %s32, %s23
      %p34 = scmp.ge.s32.totalorder %s33, 2
      %s35 = scalar_select %p34, 0, %s33
      %s36 = ssub.s32 %s23, %s35
      %s37 = ssub.s32 %s24, %s31
      %s38 = sor.u32 %s36, %s37
      %p39 = scmp.eq.s32.totalorder %s38, 0
      %s41 = sadd.s32 %s40, 1
      %s42 = scalar_select %p39, %s40, %s41
      %p45 = pneg %p39
      %p46 = scmp.eq.s32.totalorder %s16, 3
      %p47 = por %p45, %p46
      %p48 = scmp.ne.s32.totalorder %s40, %s43
      %p49 = scmp.eq.s32.totalorder %s16, 0
      %p50 = por %p48, %p49
      %p51 = scmp.ne.s32.totalorder %s40, %s43
      %p52 = scmp.eq.s32.totalorder %s21, 3
      %p53 = por %p51, %p52
      %p54 = scmp.ne.s32.totalorder %s43, %s44
      %p55 = scmp.eq.s32.totalorder %s21, 0
      %p56 = por %p54, %p55
      %p57 = scmp.ne.s32.totalorder %s43, %s44
      %p58 = scmp.eq.s32.totalorder %s22, 3
      %p59 = por %p57, %p58
      %p61 = scmp.ne.s32.totalorder %s44, %s60
      %p62 = scmp.eq.s32.totalorder %s22, 0
      %p63 = por %p61, %p62
      %s65 = sadd.s32 %s64, 1
      %p68 = scmp.eq.s32.totalorder %s16, 3
      %p69 = scmp.ne.s32.totalorder %s64, %s66
      %p70 = scmp.eq.s32.totalorder %s16, 0
      %p71 = por %p69, %p70
      %p72 = scmp.ne.s32.totalorder %s64, %s66
      %p73 = scmp.eq.s32.totalorder %s21, 3
      %p74 = por %p72, %p73
      %p75 = scmp.ne.s32.totalorder %s66, %s67
      %p76 = scmp.eq.s32.totalorder %s21, 0
      %p77 = por %p75, %p76
      %p78 = scmp.ne.s32.totalorder %s66, %s67
      %p79 = scmp.eq.s32.totalorder %s22, 3
      %p80 = por %p78, %p79
      %p82 = scmp.ne.s32.totalorder %s67, %s81
      %p83 = scmp.eq.s32.totalorder %s22, 0
      %p84 = por %p82, %p83
      %s86 = sadd.s32 %s85, 1
      %p89 = scmp.eq.s32.totalorder %s16, 3
      %p90 = scmp.ne.s32.totalorder %s85, %s87
      %p91 = scmp.eq.s32.totalorder %s16, 0
      %p92 = por %p90, %p91
      %p93 = scmp.ne.s32.totalorder %s85, %s87
      %p94 = scmp.eq.s32.totalorder %s21, 3
      %p95 = por %p93, %p94
      %p96 = scmp.ne.s32.totalorder %s87, %s88
      %p97 = scmp.eq.s32.totalorder %s21, 0
      %p98 = por %p96, %p97
      %p99 = scmp.ne.s32.totalorder %s87, %s88
      %p100 = scmp.eq.s32.totalorder %s22, 3
      %p101 = por %p99, %p100
      %p103 = scmp.ne.s32.totalorder %s88, %s102
      %p104 = scmp.eq.s32.totalorder %s22, 0
      %p105 = por %p103, %p104
      %s106 = ssub.s32 %s23, %s35
      %s107 = ssub.s32 %s24, %s31
      %s108 = sor.u32 %s106, %s107
      %p109 = scmp.eq.s32.totalorder %s108, 0
      %s111 = sadd.s32 %s110, 1
      %s112 = scalar_select %p109, %s110, %s111
      %p115 = pneg %p109
      %p116 = scmp.eq.s32.totalorder %s16, 3
      %p117 = por %p115, %p116
      %p118 = scmp.ne.s32.totalorder %s110, %s113
      %p119 = scmp.eq.s32.totalorder %s16, 0
      %p120 = por %p118, %p119
      %p121 = scmp.ne.s32.totalorder %s110, %s113
      %p122 = scmp.eq.s32.totalorder %s21, 3
      %p123 = por %p121, %p122
      %p124 = scmp.ne.s32.totalorder %s113, %s114
      %p125 = scmp.eq.s32.totalorder %s21, 0
      %p126 = por %p124, %p125
      %p127 = scmp.ne.s32.totalorder %s113, %s114
      %p128 = scmp.eq.s32.totalorder %s22, 3
      %p129 = por %p127, %p128
      %p131 = scmp.ne.s32.totalorder %s114, %s130
      %p132 = scmp.eq.s32.totalorder %s22, 0
      %p133 = por %p131, %p132
      %p134 = scmp.le.s32.totalorder 1, %s16
      %p135 = scmp.lt.s32.totalorder %s16, 5
      %p136 = pnand %p134, %p135
      %p137 = pneg %p136
      // Predicated region
      $region9: #{tpu_custom_call.1} parent=5 // pred_check
        _
      $region10: #{tpu_custom_call.1} parent=5 // pred_check_branch
        %139 = sbr.rel (%p136) target = $region12
      $region11: #{tpu_custom_call.1} parent=5 // pred_region
        %s140 = ssub.s32 %s16, 1
        // Predicated region
        $region13: #{tpu_custom_call.1} parent=11 // pred_check
          %p141 = pneg %p77
        $region14: #{tpu_custom_call.1} parent=11 // pred_check_branch
          %143 = sbr.rel (%p141) target = $region16
        $region15: #{tpu_custom_call.1} parent=11 // pred_region
          %s145 = ssub.s32 512, 512
          %146 = vsyncadd [#allocation6], %s145
          %s147 = sshll.u32 [#allocation5], 4
          %s148 = int_to_ptr.vmem [resolvable:$true] %s147
          %153 = dma.hbm_to_vmem [thread:$0]  %s1, 512, %s148, [#allocation6], 128, 128, 8
        $region16: #{tpu_custom_call.1} parent=11 // pred_fallthru
          _
        // Predicated region
        $region17: #{tpu_custom_call.1} parent=11 // pred_check
          %p154 = pneg %p98
        $region18: #{tpu_custom_call.1} parent=11 // pred_check_branch
          %156 = sbr.rel (%p154) target = $region20
        $region19: #{tpu_custom_call.1} parent=11 // pred_region
          _
        $region20: #{tpu_custom_call.1} parent=11 // pred_fallthru
          _
      $region12: #{tpu_custom_call.1} parent=5 // pred_fallthru
        _
      %p157 = scmp.lt.s32.totalorder %s16, 4
      // Predicated region
      $region21: #{tpu_custom_call.1} parent=5 // pred_check
        %p158 = pneg %p157
      $region22: #{tpu_custom_call.1} parent=5 // pred_check_branch
        %160 = sbr.rel (%p158) target = $region24
      $region23: #{tpu_custom_call.1} parent=5 // pred_region
        // Predicated region
        $region25: #{tpu_custom_call.1} parent=23 // pred_check
          %p161 = pneg %p50
        $region26: #{tpu_custom_call.1} parent=23 // pred_check_branch
          %163 = sbr.rel (%p161) target = $region28
        $region27: #{tpu_custom_call.1} parent=23 // pred_region
          %s164 = sand.u32 %s40, 1
          %s165 = scalar_lea.sflag [#allocation3], %s164
          %s166 = sand.u32 %s40, 1
          %s167 = smul.addr %s166, 8
          %s168 = scalar_lea.vmem [#allocation2], %s167
          %s170 = ssub.s32 128, 128
          %171 = vsyncadd %s165, %s170
          %s172 = smul.addr %s23, 2
          %s173 = sadd.s32 %s24, %s172
          %s174 = smul.addr %s173, 128
          %s175 = scalar_lea.hbm %s0, %s174
          %s177 = sshll.u32 %s168, 4
          %s178 = int_to_ptr.vmem [resolvable:$true] %s177
          %180 = dma.hbm_to_vmem [thread:$0]  %s175, 128, %s178, %s165
        $region28: #{tpu_custom_call.1} parent=23 // pred_fallthru
          _
      $region24: #{tpu_custom_call.1} parent=5 // pred_fallthru
        _
      %p181 = scmp.le.s32.totalorder 1, %s16
      %p182 = scmp.lt.s32.totalorder %s16, 5
      %p183 = pnand %p181, %p182
      %p184 = pneg %p183
      // Predicated region
      $region29: #{tpu_custom_call.1} parent=5 // pred_check
        _
      $region30: #{tpu_custom_call.1} parent=5 // pred_check_branch
        %186 = sbr.rel (%p183) target = $region32
      $region31: #{tpu_custom_call.1} parent=5 // pred_region
        %s187 = ssub.s32 %s16, 1
        %s188 = sand.u32 %s43, 1
        %s189 = scalar_lea.sflag [#allocation3], %s188
        %s190 = sand.u32 %s43, 1
        %s191 = smul.addr %s190, 8
        %s192 = scalar_lea.vmem [#allocation2], %s191
        // Predicated region
        $region33: #{tpu_custom_call.1} parent=31 // pred_check
          %p193 = pneg %p56
        $region34: #{tpu_custom_call.1} parent=31 // pred_check_branch
          %195 = sbr.rel (%p193) target = $region36
        $region35: #{tpu_custom_call.1} parent=31 // pred_region
          %196 = dma.done %s189, 128
        $region36: #{tpu_custom_call.1} parent=31 // pred_fallthru
          _
        // Predicated region
        $region37: #{tpu_custom_call.1} parent=31 // pred_check
          %p197 = pneg %p77
        $region38: #{tpu_custom_call.1} parent=31 // pred_check_branch
          %199 = sbr.rel (%p197) target = $region40
        $region39: #{tpu_custom_call.1} parent=31 // pred_region
          %200 = dma.done [#allocation6], 512
        $region40: #{tpu_custom_call.1} parent=31 // pred_fallthru
          _
        %s201 = sand.u32 %s43, 1
        %s202 = scalar_lea.sflag [#allocation3], %s201
        %s203 = sand.u32 %s43, 1
        %s204 = smul.addr %s203, 8
        %s205 = scalar_lea.vmem [#allocation2], %s204
        %p206 = pneg %p56
        %p207 = pneg %p53
        %p208 = pneg %p77
        %p209 = pneg %p74
        %p210 = pneg %p98
        %p211 = pneg %p95
        %p212 = pneg %p126
        %p213 = pneg %p123
        %s214 = sand.u32 %s113, 1
        %s215 = scalar_lea.sflag [#allocation4], %s214
        %s216 = sand.u32 %s113, 1
        %s217 = smul.addr %s216, 8
        %s218 = scalar_lea.vmem [#allocation7], %s217
        %v219 = vld [vmem:[%s192] sm:$0xff]
        %v220 = vld [vmem:[#allocation5] sm:$0xff]
        %v221 = vld [vmem:[#allocation5 + $0x8] sm:$0xff]
        %v222 = vld [vmem:[#allocation5 + $0x10] sm:$0xff]
        %v223 = vld [vmem:[#allocation5 + $0x18] sm:$0xff]
        %v224 = vld [vmem:[%s2] sm:$0x1]
        %v226 = vlaneseq
        %v227 = vshrl.u32 %v226, 7
        %v228 = vsub.s32 0, %v227
        %v229 = vrot.slane %v224, %v228
        %vm231 = vcmask 261120
        %v233 = vsel %vm231, %v219, 0
        %235 = vmatprep.subr.mxu0 0.0
        %236 = vmatpush1.msra.mxu0 %v220
        %237 = vmatprep.subr.mxu0 0.0
        %238 = vmatpush1.msra.mxu0 %v221
        %239 = vmatprep.subr.mxu0 0.0
        %240 = vmatpush1.msra.mxu0 %v222
        %241 = vmatprep.subr.mxu0 0.0
        %242 = vmatpush1.msra.mxu0 %v223
        %243 = vmatprep.subr.mxu0 0.0
        %244 = vmatpush1.msra.mxu0 0.0
        %245 = vmatprep.subr.mxu0 0.0
        %246 = vmatpush1.msra.mxu0 0.0
        %247 = vmatprep.subr.mxu0 0.0
        %248 = vmatpush1.msra.mxu0 0.0
        %249 = vmatprep.subr.mxu0 0.0
        %250 = vmatpush1.msra.mxu0 0.0
        %251 = vmatprep.subr.mxu0 0.0
        %252 = vmatpush1.msra.mxu0 0.0
        %253 = vmatprep.subr.mxu0 0.0
        %254 = vmatpush1.msra.mxu0 0.0
        %255 = vmatprep.subr.mxu0 0.0
        %256 = vmatpush1.msra.mxu0 0.0
        %257 = vmatprep.subr.mxu0 0.0
        %258 = vmatpush1.msra.mxu0 0.0
        %259 = vmatprep.subr.mxu0 0.0
        %260 = vmatpush1.msra.mxu0 0.0
        %261 = vmatprep.subr.mxu0 0.0
        %262 = vmatpush1.msra.mxu0 0.0
        %263 = vmatprep.subr.mxu0 0.0
        %264 = vmatpush1.msra.mxu0 0.0
        %265 = vmatprep.subr.mxu0 0.0
        %266 = vmatpush1.msra.mxu0 0.0
        %267 = vmatprep.subr.mxu0 0.0
        %268 = vmatpush1.msra.mxu0 0.0
        %269 = vmatprep.subr.mxu0 0.0
        %270 = vmatpush1.msra.mxu0 0.0
        %271 = vmatprep.subr.mxu0 0.0
        %272 = vmatpush1.msra.mxu0 0.0
        %273 = vmatprep.subr.mxu0 0.0
        %274 = vmatpush1.msra.mxu0 0.0
        %275 = vmatprep.subr.mxu0 0.0
        %276 = vmatpush1.msra.mxu0 0.0
        %277 = vmatprep.subr.mxu0 0.0
        %278 = vmatpush1.msra.mxu0 0.0
        %279 = vmatprep.subr.mxu0 0.0
        %280 = vmatpush1.msra.mxu0 0.0
        %281 = vmatprep.subr.mxu0 0.0
        %282 = vmatpush1.msra.mxu0 0.0
        %283 = vmatprep.subr.mxu0 0.0
        %284 = vmatpush1.msra.mxu0 0.0
        %285 = vmatprep.subr.mxu0 0.0
        %286 = vmatpush1.msra.mxu0 0.0
        %287 = vmatprep.subr.mxu0 0.0
        %288 = vmatpush1.msra.mxu0 0.0
        %289 = vmatprep.subr.mxu0 0.0
        %290 = vmatpush1.msra.mxu0 0.0
        %291 = vmatprep.subr.mxu0 0.0
        %292 = vmatpush1.msra.mxu0 0.0
        %293 = vmatprep.subr.mxu0 0.0
        %294 = vmatpush1.msra.mxu0 0.0
        %295 = vmatprep.subr.mxu0 0.0
        %296 = vmatpush1.msra.mxu0 0.0
        %297 = vmatprep.subr.mxu0 0.0
        %298 = vmatpush1.msra.mxu0 0.0
        %299 = vmatprep.mubr.f32.mxu0 0.0
        %300 = vmatmul.mubr.f32.gmra.mrb[0].mxu0 %v233
        %v301 = vpop.f32.mrb[0].mxu0
        %v302 = vadd.f32 %v229, %v301
        %v303 = vpop.f32.mrb[0].mxu0
        %304 = vdwg.mxu0
        %v305 = vmul.f32 %v302, 0.25
        %306 = vst.msk [vmem:[%s218] sm:$0xff] %vm231, %v305
        %s307 = sand.u32 %s113, 1
        %s308 = scalar_lea.sflag [#allocation4], %s307
        %s309 = sand.u32 %s113, 1
        %s310 = smul.addr %s309, 8
        %s311 = scalar_lea.vmem [#allocation7], %s310
        // Predicated region
        $region41: #{tpu_custom_call.1} parent=31 // pred_check
          %p312 = pneg %p123
        $region42: #{tpu_custom_call.1} parent=31 // pred_check_branch
          %314 = sbr.rel (%p312) target = $region44
        $region43: #{tpu_custom_call.1} parent=31 // pred_region
          %s316 = ssub.s32 128, 128
          %317 = vsyncadd %s308, %s316
          %s318 = smul.addr %s25, 2
          %s319 = sadd.s32 %s26, %s318
          %s320 = smul.addr %s319, 128
          %s321 = scalar_lea.hbm %s3, %s320
          %s323 = sshll.u32 %s311, 4
          %s324 = int_to_ptr.vmem [resolvable:$true] %s323
          %326 = dma.vmem_to_hbm [thread:$0]  %s324, 128, %s321, %s308
        $region44: #{tpu_custom_call.1} parent=31 // pred_fallthru
          _
      $region32: #{tpu_custom_call.1} parent=5 // pred_fallthru
        _
      %p327 = scmp.le.s32.totalorder 2, %s16
      // Predicated region
      $region45: #{tpu_custom_call.1} parent=5 // pred_check
        %p328 = pneg %p327
      $region46: #{tpu_custom_call.1} parent=5 // pred_check_branch
        %330 = sbr.rel (%p328) target = $region48
      $region47: #{tpu_custom_call.1} parent=5 // pred_region
        %s331 = ssub.s32 %s16, 2
        // Predicated region
        $region49: #{tpu_custom_call.1} parent=47 // pred_check
          %p332 = pneg %p129
        $region50: #{tpu_custom_call.1} parent=47 // pred_check_branch
          %334 = sbr.rel (%p332) target = $region52
        $region51: #{tpu_custom_call.1} parent=47 // pred_region
          %s335 = sand.u32 %s114, 1
          %s336 = scalar_lea.sflag [#allocation4], %s335
          %s337 = sand.u32 %s114, 1
          %s338 = smul.addr %s337, 8
          %s339 = scalar_lea.vmem [#allocation7], %s338
          %340 = dma.done %s336, 128
        $region52: #{tpu_custom_call.1} parent=47 // pred_fallthru
          _
      $region48: #{tpu_custom_call.1} parent=5 // pred_fallthru
        _
    $region6: #{tpu_custom_call.1} parent=1 // loop_footer
      %s20 = sadd.s32 1, %s16
    $region7: #{tpu_custom_call.1} parent=1 // loop_footer_branch
      %15 = sbr.rel target = $region3
    $region8: #{tpu_custom_call.1} parent=1 // loop_exit
      _
    %341 = vsyncpa [#allocation3], 1
    %s342 = scalar_lea.sflag [#allocation3], 1
    %343 = vsyncpa %s342, 1
    %344 = vsyncpa [#allocation6], 1
    %345 = vsyncpa [#allocation4], 1
    %s346 = scalar_lea.sflag [#allocation4], 1
    %347 = vsyncpa %s346, 1

</llo_original>
